<compile_context>
chip_gen: v7x
topology: tpu7x:2x2x1
jax: 0.10.0
libtpu: 0.0.40
codegen_flags: <defaults>
</compile_context>

<pallas_src>
import jax
import jax.numpy as jnp
from jax.experimental import pallas as pl
from jax.experimental.pallas import tpu as pltpu

K = 3 * 3 * 3                 # 27
MAX_TILE_M = 16384            # ~1.7 MiB real input DMA / step; VMEM-safe on all gens
MIN_GRID_STEPS = 4            # keep >= 4 balanced grid steps (v7x has 2 TensorCores)
_SMALL_N_THRESHOLD = 4096     # below this, plain XLA gemv beats kernel launch overhead


def _round_up(v, m):
    return ((v + m - 1) // m) * m


def _linear_kernel(w_ref, x_ref, o_ref):
    # w_ref: (1, K)       weight row, resident in VMEM (same block every step)
    # x_ref: (TILE_M, K)  row-major input tile (rows on sublanes, K on lanes)
    # o_ref: (TILE_M, 1)  per-row dot products
    x = x_ref[...]                                          # (TILE_M, K) f32
    w = w_ref[...]                                          # (1, K)      f32
    # VPU broadcast-multiply + XLU lane-reduce over the 27-wide minor axis.
    o_ref[...] = jnp.sum(x * w, axis=1, keepdims=True).astype(o_ref.dtype)


def _choose_tile_m(n):
    # Aim for >= MIN_GRID_STEPS balanced steps, capped so the double-buffered
    # (lane-padded) input + output tiles stay well inside every generation's
    # VMEM (v7x: 64 MiB physical).  Multiple of 8 for the sublane constraint.
    tile = _round_up(pl.cdiv(n, MIN_GRID_STEPS), 8)
    return max(8, min(MAX_TILE_M, tile))


def _linear_pallas(x2d, w):
    n = x2d.shape[0]
    tile_m = _choose_tile_m(n)
    n_pad = _round_up(n, tile_m)
    if n_pad != n:
        # Zero rows -> zero outputs, sliced off below.  Row-axis pad only.
        x2d = jnp.pad(x2d, ((0, n_pad - n), (0, 0)))
    grid = (n_pad // tile_m,)

    out = pl.pallas_call(
        _linear_kernel,
        out_shape=jax.ShapeDtypeStruct((n_pad, 1), jnp.float32),
        grid_spec=pltpu.PrefetchScalarGridSpec(
            num_scalar_prefetch=0,
            grid=grid,
            in_specs=[
                # Weight: same block every step -> stays resident, no re-DMA.
                pl.BlockSpec((1, K), lambda i: (0, 0)),
                # Input: one contiguous (TILE_M, 27) row-major tile per step
                # (27 == full minor dim, so the (8,128) rule is satisfied).
                pl.BlockSpec((tile_m, K), lambda i: (i, 0)),
            ],
            out_specs=pl.BlockSpec((tile_m, 1), lambda i: (i, 0)),
        ),
        compiler_params=pltpu.CompilerParams(
            dimension_semantics=("parallel",),   # shard tiles across TCs on v7x
            vmem_limit_bytes=40 * 1024 * 1024,   # ~32 MiB used at TILE_M=16384
        ),
        cost_estimate=pl.CostEstimate(
            flops=2 * n_pad * K,
            transcendentals=0,
            bytes_accessed=n_pad * K * 4 + n_pad * 4 + K * 4,
        ),
    )(w, x2d)

    return out[:n]                                          # (N, 1)


@jax.jit
def net_forward(x, w):
    """x: (N, 3, 3, 3) float32, w: (1, 27) float32 -> (N, 1) float32."""
    x2d = x.reshape(-1, K)        # same semantics as torch's x.view(-1, 27)
    n = x2d.shape[0]

    # Tiny batches: kernel launch + per-step overhead dwarfs a 54-FLOP matvec.
    if n < _SMALL_N_THRESHOLD:
        return jnp.dot(x2d, w.T, precision=jax.lax.Precision.HIGHEST)

    return _linear_pallas(x2d, w)


if __name__ == "__main__":
    key = jax.random.PRNGKey(0)
    k_x, k_w, k_x2 = jax.random.split(key, 3)

    # Deterministic synthetic parameters: fc1.weight ~ randn(1, 27)
    fc_weight = jax.random.normal(k_w, (1, K), dtype=jnp.float32)

    # Pallas path: N = 5000 -> tile_m = 1256, 4 balanced grid steps, 24 padded
    # rows (exercises tiling, pipelining, and the partial-tile pad/slice).
    x_big = jax.random.normal(k_x, (5000, 3, 3, 3), dtype=jnp.float32)
    y_big = jax.block_until_ready(net_forward(x_big, fc_weight))
    y_big_ref = x_big.reshape(-1, K) @ fc_weight.T
    assert y_big.shape == (5000, 1)
    assert jnp.allclose(y_big, y_big_ref, atol=1e-4, rtol=1e-5)

    # Small-batch path (XLA bypass), matching the original tiny test case.
    x_small = jax.random.normal(k_x2, (2, 3, 3, 3), dtype=jnp.float32)
    y_small = jax.block_until_ready(net_forward(x_small, fc_weight))
    y_small_ref = x_small.reshape(-1, K) @ fc_weight.T
    assert y_small.shape == (2, 1)
    assert jnp.allclose(y_small, y_small_ref, atol=1e-4, rtol=1e-5)

    print("KERNEL_OK")
</pallas_src>

<mosaic_0001>
module attributes {stable_mosaic.version = 11 : i64} {
  func.func @_linear_kernel(%arg0: i32, %arg1: memref<1x27xf32, #tpu.memory_space<vmem>>, %arg2: memref<1256x27xf32, #tpu.memory_space<vmem>>, %arg3: memref<1256x1xf32, #tpu.memory_space<vmem>>) attributes {dimension_semantics = [#tpu.dimension_semantics<parallel>], iteration_bounds = array<i64: 4>, scalar_prefetch = 0 : i64, scratch_operands = 0 : i64, tpu.core_type = #tpu.core_type<tc>, window_params = [{pipeline_mode = #tpu.pipeline_mode<synchronous>, transform_indices = @transform_0, window_bounds = array<i64: 1, 27>}, {transform_indices = @transform_1, window_bounds = array<i64: 1256, 27>}, {transform_indices = @transform_2, window_bounds = array<i64: 1256, 1>}]} {
    %c0 = arith.constant 0 : index
    %c0_0 = arith.constant 0 : index
    %0 = vector.load %arg2[%c0, %c0_0] : memref<1256x27xf32, #tpu.memory_space<vmem>>, vector<1256x27xf32>
    %c0_1 = arith.constant 0 : index
    %c0_2 = arith.constant 0 : index
    %1 = vector.load %arg1[%c0_1, %c0_2] : memref<1x27xf32, #tpu.memory_space<vmem>>, vector<1x27xf32>
    %2 = vector.broadcast %1 : vector<1x27xf32> to vector<1256x27xf32>
    %3 = arith.mulf %0, %2 : vector<1256x27xf32>
    %cst = arith.constant dense<0.000000e+00> : vector<1256xf32>
    %4 = vector.multi_reduction <add>, %3, %cst [1] : vector<1256x27xf32> to vector<1256xf32>
    %5 = vector.shape_cast %4 : vector<1256xf32> to vector<1256x1xf32>
    %c0_3 = arith.constant 0 : index
    %c0_4 = arith.constant 0 : index
    %6 = vector.load %arg3[%c0_3, %c0_4] : memref<1256x1xf32, #tpu.memory_space<vmem>>, vector<1256x1xf32>
    tpu.vector_store %arg3[%c0_3, %c0_4], %5 {strides = array<i32>} : memref<1256x1xf32, #tpu.memory_space<vmem>>, vector<1256x1xf32>,
    return
  }
  func.func @transform_0(%arg0: i32) -> (i32, i32) {
    %c0_i32 = arith.constant 0 : i32
    %c0_i32_0 = arith.constant 0 : i32
    %c0_i32_1 = arith.constant 0 : i32
    return %c0_i32, %c0_i32_0 : i32, i32
  }
  func.func @transform_1(%arg0: i32) -> (i32, i32) {
    %c0_i32 = arith.constant 0 : i32
    %c0_i32_0 = arith.constant 0 : i32
    return %arg0, %c0_i32 : i32, i32
  }
  func.func @transform_2(%arg0: i32) -> (i32, i32) {
    %c0_i32 = arith.constant 0 : i32
    %c0_i32_0 = arith.constant 0 : i32
    return %arg0, %c0_i32 : i32, i32
  }
}

</mosaic_0001>

<llo_original>
// kernel: net_forward.1
$region0: #{net_forward.1}
  #allocation0 [shape = 'u32[]', space=smem, size = 0x4, offset = 0x4, fixed_abs, tag = 'smem constant byte address 0x4 - core index']
  #allocation1 [shape = 'u32[144,128]{1,0:T(1,128)}', space=vmem, size = 0x12000, scoped, tag = 'internal scratch']
  %s0 = inlined_call_operand.vmem [shape: f32[1,27], index: 0, kind: input, shape index: {}]
  %s1 = inlined_call_operand.vmem [shape: f32[5024,27], index: 1, kind: input, shape index: {}]
  %s2 = inlined_call_operand.vmem [shape: f32[5024,1], index: 2, kind: output, shape index: {}]
  %s3 = sld [smem:[#allocation0]]
  $region41: #{net_forward.1} parent=0
    _
  %s5 = ssub.s32 1, %s3
  %s6 = scalar_select 0, %s5, %s3
  loop: start=0, step=1, limit=6
  $region2: #{net_forward.1} parent=0 // loop_pre_header
    _
  $region3: #{net_forward.1} parent=0 // loop_header
    %s8 = sphi 0, %s12
    %p9 = scmp.ge.s32.totalorder %s8, 6
    %s16 = sphi 0, %s16
    %s18 = sphi 0, %s16
    %s19 = sphi 0, %s18
    %s33 = sphi 0, %s19
    %s39 = sphi 0, %s41
    %s42 = sphi 0, %s39
    %s43 = sphi 0, %s42
    %s59 = sphi 0, %s43
    %s65 = sphi 0, %s67
    %s68 = sphi 0, %s65
    %s69 = sphi 0, %s68
    %s85 = sphi 0, %s69
  $region4: #{net_forward.1} parent=0 // loop_header_branch
    %11 = sbr.rel (%p9) target = $region8
  $region5: #{net_forward.1} parent=0 // loop_body
    %s13 = ssub.s32 %s8, 1
    %s14 = ssub.s32 %s8, 2
    %s15 = sadd.s32 %s8, 1
    %s17 = sadd.s32 %s16, 1
    %p20 = scmp.eq.s32.totalorder %s8, 3
    %p21 = scmp.ne.s32.totalorder %s16, %s18
    %p22 = scmp.eq.s32.totalorder %s8, 0
    %p23 = por %p21, %p22
    %p24 = scmp.ne.s32.totalorder %s16, %s18
    %p25 = scmp.eq.s32.totalorder %s13, 3
    %p26 = por %p24, %p25
    %p27 = scmp.ne.s32.totalorder %s18, %s19
    %p28 = scmp.eq.s32.totalorder %s13, 0
    %p29 = por %p27, %p28
    %p30 = scmp.ne.s32.totalorder %s18, %s19
    %p31 = scmp.eq.s32.totalorder %s14, 3
    %p32 = por %p30, %p31
    %p34 = scmp.ne.s32.totalorder %s19, %s33
    %p35 = scmp.eq.s32.totalorder %s14, 0
    %p36 = por %p34, %p35
    %s37 = ssub.s32 %s8, %s15
    %p38 = scmp.eq.s32.totalorder %s37, 0
    %s40 = sadd.s32 %s39, 1
    %s41 = scalar_select %p38, %s39, %s40
    %p44 = pneg %p38
    %p45 = scmp.eq.s32.totalorder %s8, 3
    %p46 = por %p44, %p45
    %p47 = scmp.ne.s32.totalorder %s39, %s42
    %p48 = scmp.eq.s32.totalorder %s8, 0
    %p49 = por %p47, %p48
    %p50 = scmp.ne.s32.totalorder %s39, %s42
    %p51 = scmp.eq.s32.totalorder %s13, 3
    %p52 = por %p50, %p51
    %p53 = scmp.ne.s32.totalorder %s42, %s43
    %p54 = scmp.eq.s32.totalorder %s13, 0
    %p55 = por %p53, %p54
    %p56 = scmp.ne.s32.totalorder %s42, %s43
    %p57 = scmp.eq.s32.totalorder %s14, 3
    %p58 = por %p56, %p57
    %p60 = scmp.ne.s32.totalorder %s43, %s59
    %p61 = scmp.eq.s32.totalorder %s14, 0
    %p62 = por %p60, %p61
    %s63 = ssub.s32 %s8, %s15
    %p64 = scmp.eq.s32.totalorder %s63, 0
    %s66 = sadd.s32 %s65, 1
    %s67 = scalar_select %p64, %s65, %s66
    %p70 = pneg %p64
    %p71 = scmp.eq.s32.totalorder %s8, 3
    %p72 = por %p70, %p71
    %p73 = scmp.ne.s32.totalorder %s65, %s68
    %p74 = scmp.eq.s32.totalorder %s8, 0
    %p75 = por %p73, %p74
    %p76 = scmp.ne.s32.totalorder %s65, %s68
    %p77 = scmp.eq.s32.totalorder %s13, 3
    %p78 = por %p76, %p77
    %p79 = scmp.ne.s32.totalorder %s68, %s69
    %p80 = scmp.eq.s32.totalorder %s13, 0
    %p81 = por %p79, %p80
    %p82 = scmp.ne.s32.totalorder %s68, %s69
    %p83 = scmp.eq.s32.totalorder %s14, 3
    %p84 = por %p82, %p83
    %p86 = scmp.ne.s32.totalorder %s69, %s85
    %p87 = scmp.eq.s32.totalorder %s14, 0
    %p88 = por %p86, %p87
    %p89 = scmp.le.s32.totalorder 1, %s8
    %p90 = scmp.lt.s32.totalorder %s8, 5
    %p91 = pnand %p89, %p90
    %p92 = pneg %p91
    // Predicated region
    $region9: #{net_forward.1} parent=5 // pred_check
      _
    $region10: #{net_forward.1} parent=5 // pred_check_branch
      %94 = sbr.rel (%p91) target = $region12
    $region11: #{net_forward.1} parent=5 // pred_region
      %s95 = ssub.s32 %s8, 1
      // Predicated region
      $region13: #{net_forward.1} parent=11 // pred_check
        %p96 = pneg %p29
      $region14: #{net_forward.1} parent=11 // pred_check_branch
        %98 = sbr.rel (%p96) target = $region16
      $region15: #{net_forward.1} parent=11 // pred_region
        _
      $region16: #{net_forward.1} parent=11 // pred_fallthru
        _
    $region12: #{net_forward.1} parent=5 // pred_fallthru
      _
    %p99 = scmp.lt.s32.totalorder %s8, 4
    // Predicated region
    $region17: #{net_forward.1} parent=5 // pred_check
      %p100 = pneg %p99
    $region18: #{net_forward.1} parent=5 // pred_check_branch
      %102 = sbr.rel (%p100) target = $region20
    $region19: #{net_forward.1} parent=5 // pred_region
      // Predicated region
      $region21: #{net_forward.1} parent=19 // pred_check
        %p103 = pneg %p49
      $region22: #{net_forward.1} parent=19 // pred_check_branch
        %105 = sbr.rel (%p103) target = $region24
      $region23: #{net_forward.1} parent=19 // pred_region
        %s106 = smul.u32 157, %s8
        %p107 = scmp.lt.s32.totalorder %s106, 627
        %s108 = scalar_select %p107, %s106, 627
        %s109 = smul.addr %s108, 8
        %s110 = scalar_lea.vmem %s1, %s109
        %s111 = smul.u32 157, %s8
      $region24: #{net_forward.1} parent=19 // pred_fallthru
        _
    $region20: #{net_forward.1} parent=5 // pred_fallthru
      _
    %p112 = scmp.le.s32.totalorder 1, %s8
    %p113 = scmp.lt.s32.totalorder %s8, 5
    %p114 = pnand %p112, %p113
    %p115 = pneg %p114
    // Predicated region
    $region25: #{net_forward.1} parent=5 // pred_check
      _
    $region26: #{net_forward.1} parent=5 // pred_check_branch
      %117 = sbr.rel (%p114) target = $region28
    $region27: #{net_forward.1} parent=5 // pred_region
      %s118 = ssub.s32 %s8, 1
      %p119 = pneg %p29
      %p120 = pneg %p26
      %s121 = smul.u32 157, %s13
      %p122 = scmp.lt.s32.totalorder %s121, 627
      %s123 = scalar_select %p122, %s121, 627
      %s124 = smul.addr %s123, 8
      %s125 = scalar_lea.vmem %s1, %s124
      %p126 = pneg %p55
      %p127 = pneg %p52
      %p128 = pneg %p81
      %p129 = pneg %p78
      %s130 = smul.u32 157, %s13
      %p131 = scmp.lt.s32.totalorder %s130, 627
      %s132 = scalar_select %p131, %s130, 627
      %s133 = smul.addr %s132, 8
      %s134 = scalar_lea.vmem %s2, %s133
      %s135 = smul.u32 157, %s13
      %p136 = scmp.lt.s32.totalorder %s135, 627
      %s137 = scalar_select %p136, %s135, 627
      %s138 = smul.addr %s137, 8
      %s139 = scalar_lea.vmem %s1, %s138
      %s140 = smul.u32 157, %s13
      %s141 = smul.u32 157, %s13
      %p142 = scmp.lt.s32.totalorder %s141, 627
      %s143 = scalar_select %p142, %s141, 627
      %s144 = smul.addr %s143, 8
      %s145 = scalar_lea.vmem %s2, %s144
      %s146 = smul.u32 157, %s13
      %v147 = vld [vmem:[%s139] sm:$0xff]
      %v148 = vld [vmem:[%s139 + $0x8] sm:$0xff]
      %v149 = vld [vmem:[%s139 + $0x10] sm:$0xff]
      %v150 = vld [vmem:[%s139 + $0x18] sm:$0xff]
      %v151 = vld [vmem:[%s139 + $0x20] sm:$0xff]
      %v152 = vld [vmem:[%s139 + $0x28] sm:$0xff]
      %v153 = vld [vmem:[%s139 + $0x30] sm:$0xff]
      %v154 = vld [vmem:[%s139 + $0x38] sm:$0xff]
      %v155 = vld [vmem:[%s139 + $0x40] sm:$0xff]
      %v156 = vld [vmem:[%s139 + $0x48] sm:$0xff]
      %v157 = vld [vmem:[%s139 + $0x50] sm:$0xff]
      %v158 = vld [vmem:[%s139 + $0x58] sm:$0xff]
      %v159 = vld [vmem:[%s139 + $0x60] sm:$0xff]
      %v160 = vld [vmem:[%s139 + $0x68] sm:$0xff]
      %v161 = vld [vmem:[%s139 + $0x70] sm:$0xff]
      %v162 = vld [vmem:[%s139 + $0x78] sm:$0xff]
      %v163 = vld [vmem:[%s139 + $0x80] sm:$0xff]
      %v164 = vld [vmem:[%s139 + $0x88] sm:$0xff]
      %v165 = vld [vmem:[%s139 + $0x90] sm:$0xff]
      %v166 = vld [vmem:[%s139 + $0x98] sm:$0xff]
      %v167 = vld [vmem:[%s139 + $0xa0] sm:$0xff]
      %v168 = vld [vmem:[%s139 + $0xa8] sm:$0xff]
      %v169 = vld [vmem:[%s139 + $0xb0] sm:$0xff]
      %v170 = vld [vmem:[%s139 + $0xb8] sm:$0xff]
      %v171 = vld [vmem:[%s139 + $0xc0] sm:$0xff]
      %v172 = vld [vmem:[%s139 + $0xc8] sm:$0xff]
      %v173 = vld [vmem:[%s139 + $0xd0] sm:$0xff]
      %v174 = vld [vmem:[%s139 + $0xd8] sm:$0xff]
      %v175 = vld [vmem:[%s139 + $0xe0] sm:$0xff]
      %v176 = vld [vmem:[%s139 + $0xe8] sm:$0xff]
      %v177 = vld [vmem:[%s139 + $0xf0] sm:$0xff]
      %v178 = vld [vmem:[%s139 + $0xf8] sm:$0xff]
      %v179 = vld [vmem:[%s139 + $0x100] sm:$0xff]
      %v180 = vld [vmem:[%s139 + $0x108] sm:$0xff]
      %v181 = vld [vmem:[%s139 + $0x110] sm:$0xff]
      %v182 = vld [vmem:[%s139 + $0x118] sm:$0xff]
      %v183 = vld [vmem:[%s139 + $0x120] sm:$0xff]
      %v184 = vld [vmem:[%s139 + $0x128] sm:$0xff]
      %v185 = vld [vmem:[%s139 + $0x130] sm:$0xff]
      %v186 = vld [vmem:[%s139 + $0x138] sm:$0xff]
      %v187 = vld [vmem:[%s139 + $0x140] sm:$0xff]
      %v188 = vld [vmem:[%s139 + $0x148] sm:$0xff]
      %v189 = vld [vmem:[%s139 + $0x150] sm:$0xff]
      %v190 = vld [vmem:[%s139 + $0x158] sm:$0xff]
      %v191 = vld [vmem:[%s139 + $0x160] sm:$0xff]
      %v192 = vld [vmem:[%s139 + $0x168] sm:$0xff]
      %v193 = vld [vmem:[%s139 + $0x170] sm:$0xff]
      %v194 = vld [vmem:[%s139 + $0x178] sm:$0xff]
      %v195 = vld [vmem:[%s139 + $0x180] sm:$0xff]
      %v196 = vld [vmem:[%s139 + $0x188] sm:$0xff]
      %v197 = vld [vmem:[%s139 + $0x190] sm:$0xff]
      %v198 = vld [vmem:[%s139 + $0x198] sm:$0xff]
      %v199 = vld [vmem:[%s139 + $0x1a0] sm:$0xff]
      %v200 = vld [vmem:[%s139 + $0x1a8] sm:$0xff]
      %v201 = vld [vmem:[%s139 + $0x1b0] sm:$0xff]
      %v202 = vld [vmem:[%s139 + $0x1b8] sm:$0xff]
      %v203 = vld [vmem:[%s139 + $0x1c0] sm:$0xff]
      %v204 = vld [vmem:[%s139 + $0x1c8] sm:$0xff]
      %v205 = vld [vmem:[%s139 + $0x1d0] sm:$0xff]
      %v206 = vld [vmem:[%s139 + $0x1d8] sm:$0xff]
      %v207 = vld [vmem:[%s139 + $0x1e0] sm:$0xff]
      %v208 = vld [vmem:[%s139 + $0x1e8] sm:$0xff]
      %v209 = vld [vmem:[%s139 + $0x1f0] sm:$0xff]
      %v210 = vld [vmem:[%s139 + $0x1f8] sm:$0xff]
      %v211 = vld [vmem:[%s139 + $0x200] sm:$0xff]
      %v212 = vld [vmem:[%s139 + $0x208] sm:$0xff]
      %v213 = vld [vmem:[%s139 + $0x210] sm:$0xff]
      %v214 = vld [vmem:[%s139 + $0x218] sm:$0xff]
      %v215 = vld [vmem:[%s139 + $0x220] sm:$0xff]
      %v216 = vld [vmem:[%s139 + $0x228] sm:$0xff]
      %v217 = vld [vmem:[%s139 + $0x230] sm:$0xff]
      %v218 = vld [vmem:[%s139 + $0x238] sm:$0xff]
      %v219 = vld [vmem:[%s139 + $0x240] sm:$0xff]
      %v220 = vld [vmem:[%s139 + $0x248] sm:$0xff]
      %v221 = vld [vmem:[%s139 + $0x250] sm:$0xff]
      %v222 = vld [vmem:[%s139 + $0x258] sm:$0xff]
      %v223 = vld [vmem:[%s139 + $0x260] sm:$0xff]
      %v224 = vld [vmem:[%s139 + $0x268] sm:$0xff]
      %v225 = vld [vmem:[%s139 + $0x270] sm:$0xff]
      %v226 = vld [vmem:[%s139 + $0x278] sm:$0xff]
      %v227 = vld [vmem:[%s139 + $0x280] sm:$0xff]
      %v228 = vld [vmem:[%s139 + $0x288] sm:$0xff]
      %v229 = vld [vmem:[%s139 + $0x290] sm:$0xff]
      %v230 = vld [vmem:[%s139 + $0x298] sm:$0xff]
      %v231 = vld [vmem:[%s139 + $0x2a0] sm:$0xff]
      %v232 = vld [vmem:[%s139 + $0x2a8] sm:$0xff]
      %v233 = vld [vmem:[%s139 + $0x2b0] sm:$0xff]
      %v234 = vld [vmem:[%s139 + $0x2b8] sm:$0xff]
      %v235 = vld [vmem:[%s139 + $0x2c0] sm:$0xff]
      %v236 = vld [vmem:[%s139 + $0x2c8] sm:$0xff]
      %v237 = vld [vmem:[%s139 + $0x2d0] sm:$0xff]
      %v238 = vld [vmem:[%s139 + $0x2d8] sm:$0xff]
      %v239 = vld [vmem:[%s139 + $0x2e0] sm:$0xff]
      %v240 = vld [vmem:[%s139 + $0x2e8] sm:$0xff]
      %v241 = vld [vmem:[%s139 + $0x2f0] sm:$0xff]
      %v242 = vld [vmem:[%s139 + $0x2f8] sm:$0xff]
      %v243 = vld [vmem:[%s139 + $0x300] sm:$0xff]
      %v244 = vld [vmem:[%s139 + $0x308] sm:$0xff]
      %v245 = vld [vmem:[%s139 + $0x310] sm:$0xff]
      %v246 = vld [vmem:[%s139 + $0x318] sm:$0xff]
      %v247 = vld [vmem:[%s139 + $0x320] sm:$0xff]
      %v248 = vld [vmem:[%s139 + $0x328] sm:$0xff]
      %v249 = vld [vmem:[%s139 + $0x330] sm:$0xff]
      %v250 = vld [vmem:[%s139 + $0x338] sm:$0xff]
      %v251 = vld [vmem:[%s139 + $0x340] sm:$0xff]
      %v252 = vld [vmem:[%s139 + $0x348] sm:$0xff]
      %v253 = vld [vmem:[%s139 + $0x350] sm:$0xff]
      %v254 = vld [vmem:[%s139 + $0x358] sm:$0xff]
      %v255 = vld [vmem:[%s139 + $0x360] sm:$0xff]
      %v256 = vld [vmem:[%s139 + $0x368] sm:$0xff]
      %v257 = vld [vmem:[%s139 + $0x370] sm:$0xff]
      %v258 = vld [vmem:[%s139 + $0x378] sm:$0xff]
      %v259 = vld [vmem:[%s139 + $0x380] sm:$0xff]
      %v260 = vld [vmem:[%s139 + $0x388] sm:$0xff]
      %v261 = vld [vmem:[%s139 + $0x390] sm:$0xff]
      %v262 = vld [vmem:[%s139 + $0x398] sm:$0xff]
      %v263 = vld [vmem:[%s139 + $0x3a0] sm:$0xff]
      %v264 = vld [vmem:[%s139 + $0x3a8] sm:$0xff]
      %v265 = vld [vmem:[%s139 + $0x3b0] sm:$0xff]
      %v266 = vld [vmem:[%s139 + $0x3b8] sm:$0xff]
      %v267 = vld [vmem:[%s139 + $0x3c0] sm:$0xff]
      %v268 = vld [vmem:[%s139 + $0x3c8] sm:$0xff]
      %v269 = vld [vmem:[%s139 + $0x3d0] sm:$0xff]
      %v270 = vld [vmem:[%s139 + $0x3d8] sm:$0xff]
      %v271 = vld [vmem:[%s139 + $0x3e0] sm:$0xff]
      %v272 = vld [vmem:[%s139 + $0x3e8] sm:$0xff]
      %v273 = vld [vmem:[%s139 + $0x3f0] sm:$0xff]
      %v274 = vld [vmem:[%s139 + $0x3f8] sm:$0xff]
      %v275 = vld [vmem:[%s139 + $0x400] sm:$0xff]
      %v276 = vld [vmem:[%s139 + $0x408] sm:$0xff]
      %v277 = vld [vmem:[%s139 + $0x410] sm:$0xff]
      %v278 = vld [vmem:[%s139 + $0x418] sm:$0xff]
      %v279 = vld [vmem:[%s139 + $0x420] sm:$0xff]
      %v280 = vld [vmem:[%s139 + $0x428] sm:$0xff]
      %v281 = vld [vmem:[%s139 + $0x430] sm:$0xff]
      %v282 = vld [vmem:[%s139 + $0x438] sm:$0xff]
      %v283 = vld [vmem:[%s139 + $0x440] sm:$0xff]
      %v284 = vld [vmem:[%s139 + $0x448] sm:$0xff]
      %v285 = vld [vmem:[%s139 + $0x450] sm:$0xff]
      %v286 = vld [vmem:[%s139 + $0x458] sm:$0xff]
      %v287 = vld [vmem:[%s139 + $0x460] sm:$0xff]
      %v288 = vld [vmem:[%s139 + $0x468] sm:$0xff]
      %v289 = vld [vmem:[%s139 + $0x470] sm:$0xff]
      %v290 = vld [vmem:[%s139 + $0x478] sm:$0xff]
      %v291 = vld [vmem:[%s139 + $0x480] sm:$0xff]
      %v292 = vld [vmem:[%s139 + $0x488] sm:$0xff]
      %v293 = vld [vmem:[%s139 + $0x490] sm:$0xff]
      %v294 = vld [vmem:[%s139 + $0x498] sm:$0xff]
      %v295 = vld [vmem:[%s139 + $0x4a0] sm:$0xff]
      %v296 = vld [vmem:[%s139 + $0x4a8] sm:$0xff]
      %v297 = vld [vmem:[%s139 + $0x4b0] sm:$0xff]
      %v298 = vld [vmem:[%s139 + $0x4b8] sm:$0xff]
      %v299 = vld [vmem:[%s139 + $0x4c0] sm:$0xff]
      %v300 = vld [vmem:[%s139 + $0x4c8] sm:$0xff]
      %v301 = vld [vmem:[%s139 + $0x4d0] sm:$0xff]
      %v302 = vld [vmem:[%s139 + $0x4d8] sm:$0xff]
      %v303 = vld [vmem:[%s139 + $0x4e0] sm:$0xff]
      %v304 = vld [vmem:[%s0] sm:$0x1]
      %v306 = vlaneseq
      %v307 = vshrl.u32 %v306, 7
      %v308 = vsub.s32 0, %v307
      %v309 = vrot.slane %v304, %v308
      %v311 = vmul.f32 %v147, %v309
      %v312 = vmul.f32 %v148, %v309
      %v313 = vmul.f32 %v149, %v309
      %v314 = vmul.f32 %v150, %v309
      %v315 = vmul.f32 %v151, %v309
      %v316 = vmul.f32 %v152, %v309
      %v317 = vmul.f32 %v153, %v309
      %v318 = vmul.f32 %v154, %v309
      %v319 = vmul.f32 %v155, %v309
      %v320 = vmul.f32 %v156, %v309
      %v321 = vmul.f32 %v157, %v309
      %v322 = vmul.f32 %v158, %v309
      %v323 = vmul.f32 %v159, %v309
      %v324 = vmul.f32 %v160, %v309
      %v325 = vmul.f32 %v161, %v309
      %v326 = vmul.f32 %v162, %v309
      %v327 = vmul.f32 %v163, %v309
      %v328 = vmul.f32 %v164, %v309
      %v329 = vmul.f32 %v165, %v309
      %v330 = vmul.f32 %v166, %v309
      %v331 = vmul.f32 %v167, %v309
      %v332 = vmul.f32 %v168, %v309
      %v333 = vmul.f32 %v169, %v309
      %v334 = vmul.f32 %v170, %v309
      %v335 = vmul.f32 %v171, %v309
      %v336 = vmul.f32 %v172, %v309
      %v337 = vmul.f32 %v173, %v309
      %v338 = vmul.f32 %v174, %v309
      %v339 = vmul.f32 %v175, %v309
      %v340 = vmul.f32 %v176, %v309
      %v341 = vmul.f32 %v177, %v309
      %v342 = vmul.f32 %v178, %v309
      %v343 = vmul.f32 %v179, %v309
      %v344 = vmul.f32 %v180, %v309
      %v345 = vmul.f32 %v181, %v309
      %v346 = vmul.f32 %v182, %v309
      %v347 = vmul.f32 %v183, %v309
      %v348 = vmul.f32 %v184, %v309
      %v349 = vmul.f32 %v185, %v309
      %v350 = vmul.f32 %v186, %v309
      %v351 = vmul.f32 %v187, %v309
      %v352 = vmul.f32 %v188, %v309
      %v353 = vmul.f32 %v189, %v309
      %v354 = vmul.f32 %v190, %v309
      %v355 = vmul.f32 %v191, %v309
      %v356 = vmul.f32 %v192, %v309
      %v357 = vmul.f32 %v193, %v309
      %v358 = vmul.f32 %v194, %v309
      %v359 = vmul.f32 %v195, %v309
      %v360 = vmul.f32 %v196, %v309
      %v361 = vmul.f32 %v197, %v309
      %v362 = vmul.f32 %v198, %v309
      %v363 = vmul.f32 %v199, %v309
      %v364 = vmul.f32 %v200, %v309
      %v365 = vmul.f32 %v201, %v309
      %v366 = vmul.f32 %v202, %v309
      %v367 = vmul.f32 %v203, %v309
      %v368 = vmul.f32 %v204, %v309
      %v369 = vmul.f32 %v205, %v309
      %v370 = vmul.f32 %v206, %v309
      %v371 = vmul.f32 %v207, %v309
      %v372 = vmul.f32 %v208, %v309
      %v373 = vmul.f32 %v209, %v309
      %v374 = vmul.f32 %v210, %v309
      %v375 = vmul.f32 %v211, %v309
      %v376 = vmul.f32 %v212, %v309
      %v377 = vmul.f32 %v213, %v309
      %v378 = vmul.f32 %v214, %v309
      %v379 = vmul.f32 %v215, %v309
      %v380 = vmul.f32 %v216, %v309
      %v381 = vmul.f32 %v217, %v309
      %v382 = vmul.f32 %v218, %v309
      %v383 = vmul.f32 %v219, %v309
      %v384 = vmul.f32 %v220, %v309
      %v385 = vmul.f32 %v221, %v309
      %v386 = vmul.f32 %v222, %v309
      %v387 = vmul.f32 %v223, %v309
      %v388 = vmul.f32 %v224, %v309
      %v389 = vmul.f32 %v225, %v309
      %v390 = vmul.f32 %v226, %v309
      %v391 = vmul.f32 %v227, %v309
      %v392 = vmul.f32 %v228, %v309
      %v393 = vmul.f32 %v229, %v309
      %v394 = vmul.f32 %v230, %v309
      %v395 = vmul.f32 %v231, %v309
      %v396 = vmul.f32 %v232, %v309
      %v397 = vmul.f32 %v233, %v309
      %v398 = vmul.f32 %v234, %v309
      %v399 = vmul.f32 %v235, %v309
      %v400 = vmul.f32 %v236, %v309
      %v401 = vmul.f32 %v237, %v309
      %v402 = vmul.f32 %v238, %v309
      %v403 = vmul.f32 %v239, %v309
      %v404 = vmul.f32 %v240, %v309
      %v405 = vmul.f32 %v241, %v309
      %v406 = vmul.f32 %v242, %v309
      %v407 = vmul.f32 %v243, %v309
      %v408 = vmul.f32 %v244, %v309
      %v409 = vmul.f32 %v245, %v309
      %v410 = vmul.f32 %v246, %v309
      %v411 = vmul.f32 %v247, %v309
      %v412 = vmul.f32 %v248, %v309
      %v413 = vmul.f32 %v249, %v309
      %v414 = vmul.f32 %v250, %v309
      %v415 = vmul.f32 %v251, %v309
      %v416 = vmul.f32 %v252, %v309
      %v417 = vmul.f32 %v253, %v309
      %v418 = vmul.f32 %v254, %v309
      %v419 = vmul.f32 %v255, %v309
      %v420 = vmul.f32 %v256, %v309
      %v421 = vmul.f32 %v257, %v309
      %v422 = vmul.f32 %v258, %v309
      %v423 = vmul.f32 %v259, %v309
      %v424 = vmul.f32 %v260, %v309
      %v425 = vmul.f32 %v261, %v309
      %v426 = vmul.f32 %v262, %v309
      %v427 = vmul.f32 %v263, %v309
      %v428 = vmul.f32 %v264, %v309
      %v429 = vmul.f32 %v265, %v309
      %v430 = vmul.f32 %v266, %v309
      %v431 = vmul.f32 %v267, %v309
      %v432 = vmul.f32 %v268, %v309
      %v433 = vmul.f32 %v269, %v309
      %v434 = vmul.f32 %v270, %v309
      %v435 = vmul.f32 %v271, %v309
      %v436 = vmul.f32 %v272, %v309
      %v437 = vmul.f32 %v273, %v309
      %v438 = vmul.f32 %v274, %v309
      %v439 = vmul.f32 %v275, %v309
      %v440 = vmul.f32 %v276, %v309
      %v441 = vmul.f32 %v277, %v309
      %v442 = vmul.f32 %v278, %v309
      %v443 = vmul.f32 %v279, %v309
      %v444 = vmul.f32 %v280, %v309
      %v445 = vmul.f32 %v281, %v309
      %v446 = vmul.f32 %v282, %v309
      %v447 = vmul.f32 %v283, %v309
      %v448 = vmul.f32 %v284, %v309
      %v449 = vmul.f32 %v285, %v309
      %v450 = vmul.f32 %v286, %v309
      %v451 = vmul.f32 %v287, %v309
      %v452 = vmul.f32 %v288, %v309
      %v453 = vmul.f32 %v289, %v309
      %v454 = vmul.f32 %v290, %v309
      %v455 = vmul.f32 %v291, %v309
      %v456 = vmul.f32 %v292, %v309
      %v457 = vmul.f32 %v293, %v309
      %v458 = vmul.f32 %v294, %v309
      %v459 = vmul.f32 %v295, %v309
      %v460 = vmul.f32 %v296, %v309
      %v461 = vmul.f32 %v297, %v309
      %v462 = vmul.f32 %v298, %v309
      %v463 = vmul.f32 %v299, %v309
      %v464 = vmul.f32 %v300, %v309
      %v465 = vmul.f32 %v301, %v309
      %v466 = vmul.f32 %v302, %v309
      %v467 = vmul.f32 %v303, %v309
      %vm468 = vcmask 220160
      %v469 = vsel %vm468, %v311, 0.0
      %470 = vadd.xlane.f32.xlu0 %v469
      %v471 = vpop.xlane.xlu0 %470
      %v472 = vsel %vm468, %v312, 0.0
      %473 = vadd.xlane.f32.xlu0 %v472
      %v474 = vpop.xlane.xlu0 %473
      %v475 = vsel %vm468, %v313, 0.0
      %476 = vadd.xlane.f32.xlu0 %v475
      %v477 = vpop.xlane.xlu0 %476
      %v478 = vsel %vm468, %v314, 0.0
      %479 = vadd.xlane.f32.xlu0 %v478
      %v480 = vpop.xlane.xlu0 %479
      %v481 = vsel %vm468, %v315, 0.0
      %482 = vadd.xlane.f32.xlu0 %v481
      %v483 = vpop.xlane.xlu0 %482
      %v484 = vsel %vm468, %v316, 0.0
      %485 = vadd.xlane.f32.xlu0 %v484
      %v486 = vpop.xlane.xlu0 %485
      %v487 = vsel %vm468, %v317, 0.0
      %488 = vadd.xlane.f32.xlu0 %v487
      %v489 = vpop.xlane.xlu0 %488
      %v490 = vsel %vm468, %v318, 0.0
      %491 = vadd.xlane.f32.xlu0 %v490
      %v492 = vpop.xlane.xlu0 %491
      %v493 = vsel %vm468, %v319, 0.0
      %494 = vadd.xlane.f32.xlu0 %v493
      %v495 = vpop.xlane.xlu0 %494
      %v496 = vsel %vm468, %v320, 0.0
      %497 = vadd.xlane.f32.xlu0 %v496
      %v498 = vpop.xlane.xlu0 %497
      %v499 = vsel %vm468, %v321, 0.0
      %500 = vadd.xlane.f32.xlu0 %v499
      %v501 = vpop.xlane.xlu0 %500
      %v502 = vsel %vm468, %v322, 0.0
      %503 = vadd.xlane.f32.xlu0 %v502
      %v504 = vpop.xlane.xlu0 %503
      %v505 = vsel %vm468, %v323, 0.0
      %506 = vadd.xlane.f32.xlu0 %v505
      %v507 = vpop.xlane.xlu0 %506
      %v508 = vsel %vm468, %v324, 0.0
      %509 = vadd.xlane.f32.xlu0 %v508
      %v510 = vpop.xlane.xlu0 %509
      %v511 = vsel %vm468, %v325, 0.0
      %512 = vadd.xlane.f32.xlu0 %v511
      %v513 = vpop.xlane.xlu0 %512
      %v514 = vsel %vm468, %v326, 0.0
      %515 = vadd.xlane.f32.xlu0 %v514
      %v516 = vpop.xlane.xlu0 %515
      %v517 = vsel %vm468, %v327, 0.0
      %518 = vadd.xlane.f32.xlu0 %v517
      %v519 = vpop.xlane.xlu0 %518
      %v520 = vsel %vm468, %v328, 0.0
      %521 = vadd.xlane.f32.xlu0 %v520
      %v522 = vpop.xlane.xlu0 %521
      %v523 = vsel %vm468, %v329, 0.0
      %524 = vadd.xlane.f32.xlu0 %v523
      %v525 = vpop.xlane.xlu0 %524
      %v526 = vsel %vm468, %v330, 0.0
      %527 = vadd.xlane.f32.xlu0 %v526
      %v528 = vpop.xlane.xlu0 %527
      %v529 = vsel %vm468, %v331, 0.0
      %530 = vadd.xlane.f32.xlu0 %v529
      %v531 = vpop.xlane.xlu0 %530
      %v532 = vsel %vm468, %v332, 0.0
      %533 = vadd.xlane.f32.xlu0 %v532
      %v534 = vpop.xlane.xlu0 %533
      %v535 = vsel %vm468, %v333, 0.0
      %536 = vadd.xlane.f32.xlu0 %v535
      %v537 = vpop.xlane.xlu0 %536
      %v538 = vsel %vm468, %v334, 0.0
      %539 = vadd.xlane.f32.xlu0 %v538
      %v540 = vpop.xlane.xlu0 %539
      %v541 = vsel %vm468, %v335, 0.0
      %542 = vadd.xlane.f32.xlu0 %v541
      %v543 = vpop.xlane.xlu0 %542
      %v544 = vsel %vm468, %v336, 0.0
      %545 = vadd.xlane.f32.xlu0 %v544
      %v546 = vpop.xlane.xlu0 %545
      %v547 = vsel %vm468, %v337, 0.0
      %548 = vadd.xlane.f32.xlu0 %v547
      %v549 = vpop.xlane.xlu0 %548
      %v550 = vsel %vm468, %v338, 0.0
      %551 = vadd.xlane.f32.xlu0 %v550
      %v552 = vpop.xlane.xlu0 %551
      %v553 = vsel %vm468, %v339, 0.0
      %554 = vadd.xlane.f32.xlu0 %v553
      %v555 = vpop.xlane.xlu0 %554
      %v556 = vsel %vm468, %v340, 0.0
      %557 = vadd.xlane.f32.xlu0 %v556
      %v558 = vpop.xlane.xlu0 %557
      %v559 = vsel %vm468, %v341, 0.0
      %560 = vadd.xlane.f32.xlu0 %v559
      %v561 = vpop.xlane.xlu0 %560
      %v562 = vsel %vm468, %v342, 0.0
      %563 = vadd.xlane.f32.xlu0 %v562
      %v564 = vpop.xlane.xlu0 %563
      %v565 = vsel %vm468, %v343, 0.0
      %566 = vadd.xlane.f32.xlu0 %v565
      %v567 = vpop.xlane.xlu0 %566
      %v568 = vsel %vm468, %v344, 0.0
      %569 = vadd.xlane.f32.xlu0 %v568
      %v570 = vpop.xlane.xlu0 %569
      %v571 = vsel %vm468, %v345, 0.0
      %572 = vadd.xlane.f32.xlu0 %v571
      %v573 = vpop.xlane.xlu0 %572
      %v574 = vsel %vm468, %v346, 0.0
      %575 = vadd.xlane.f32.xlu0 %v574
      %v576 = vpop.xlane.xlu0 %575
      %v577 = vsel %vm468, %v347, 0.0
      %578 = vadd.xlane.f32.xlu0 %v577
      %v579 = vpop.xlane.xlu0 %578
      %v580 = vsel %vm468, %v348, 0.0
      %581 = vadd.xlane.f32.xlu0 %v580
      %v582 = vpop.xlane.xlu0 %581
      %v583 = vsel %vm468, %v349, 0.0
      %584 = vadd.xlane.f32.xlu0 %v583
      %v585 = vpop.xlane.xlu0 %584
      %v586 = vsel %vm468, %v350, 0.0
      %587 = vadd.xlane.f32.xlu0 %v586
      %v588 = vpop.xlane.xlu0 %587
      %v589 = vsel %vm468, %v351, 0.0
      %590 = vadd.xlane.f32.xlu0 %v589
      %v591 = vpop.xlane.xlu0 %590
      %v592 = vsel %vm468, %v352, 0.0
      %593 = vadd.xlane.f32.xlu0 %v592
      %v594 = vpop.xlane.xlu0 %593
      %v595 = vsel %vm468, %v353, 0.0
      %596 = vadd.xlane.f32.xlu0 %v595
      %v597 = vpop.xlane.xlu0 %596
      %v598 = vsel %vm468, %v354, 0.0
      %599 = vadd.xlane.f32.xlu0 %v598
      %v600 = vpop.xlane.xlu0 %599
      %v601 = vsel %vm468, %v355, 0.0
      %602 = vadd.xlane.f32.xlu0 %v601
      %v603 = vpop.xlane.xlu0 %602
      %v604 = vsel %vm468, %v356, 0.0
      %605 = vadd.xlane.f32.xlu0 %v604
      %v606 = vpop.xlane.xlu0 %605
      %v607 = vsel %vm468, %v357, 0.0
      %608 = vadd.xlane.f32.xlu0 %v607
      %v609 = vpop.xlane.xlu0 %608
      %v610 = vsel %vm468, %v358, 0.0
      %611 = vadd.xlane.f32.xlu0 %v610
      %v612 = vpop.xlane.xlu0 %611
      %v613 = vsel %vm468, %v359, 0.0
      %614 = vadd.xlane.f32.xlu0 %v613
      %v615 = vpop.xlane.xlu0 %614
      %v616 = vsel %vm468, %v360, 0.0
      %617 = vadd.xlane.f32.xlu0 %v616
      %v618 = vpop.xlane.xlu0 %617
      %v619 = vsel %vm468, %v361, 0.0
      %620 = vadd.xlane.f32.xlu0 %v619
      %v621 = vpop.xlane.xlu0 %620
      %v622 = vsel %vm468, %v362, 0.0
      %623 = vadd.xlane.f32.xlu0 %v622
      %v624 = vpop.xlane.xlu0 %623
      %v625 = vsel %vm468, %v363, 0.0
      %626 = vadd.xlane.f32.xlu0 %v625
      %v627 = vpop.xlane.xlu0 %626
      %v628 = vsel %vm468, %v364, 0.0
      %629 = vadd.xlane.f32.xlu0 %v628
      %v630 = vpop.xlane.xlu0 %629
      %v631 = vsel %vm468, %v365, 0.0
      %632 = vadd.xlane.f32.xlu0 %v631
      %v633 = vpop.xlane.xlu0 %632
      %v634 = vsel %vm468, %v366, 0.0
      %635 = vadd.xlane.f32.xlu0 %v634
      %v636 = vpop.xlane.xlu0 %635
      %v637 = vsel %vm468, %v367, 0.0
      %638 = vadd.xlane.f32.xlu0 %v637
      %v639 = vpop.xlane.xlu0 %638
      %v640 = vsel %vm468, %v368, 0.0
      %641 = vadd.xlane.f32.xlu0 %v640
      %v642 = vpop.xlane.xlu0 %641
      %v643 = vsel %vm468, %v369, 0.0
      %644 = vadd.xlane.f32.xlu0 %v643
      %v645 = vpop.xlane.xlu0 %644
      %v646 = vsel %vm468, %v370, 0.0
      %647 = vadd.xlane.f32.xlu0 %v646
      %v648 = vpop.xlane.xlu0 %647
      %v649 = vsel %vm468, %v371, 0.0
      %650 = vadd.xlane.f32.xlu0 %v649
      %v651 = vpop.xlane.xlu0 %650
      %v652 = vsel %vm468, %v372, 0.0
      %653 = vadd.xlane.f32.xlu0 %v652
      %v654 = vpop.xlane.xlu0 %653
      %v655 = vsel %vm468, %v373, 0.0
      %656 = vadd.xlane.f32.xlu0 %v655
      %v657 = vpop.xlane.xlu0 %656
      %v658 = vsel %vm468, %v374, 0.0
      %659 = vadd.xlane.f32.xlu0 %v658
      %v660 = vpop.xlane.xlu0 %659
      %v661 = vsel %vm468, %v375, 0.0
      %662 = vadd.xlane.f32.xlu0 %v661
      %v663 = vpop.xlane.xlu0 %662
      %v664 = vsel %vm468, %v376, 0.0
      %665 = vadd.xlane.f32.xlu0 %v664
      %v666 = vpop.xlane.xlu0 %665
      %v667 = vsel %vm468, %v377, 0.0
      %668 = vadd.xlane.f32.xlu0 %v667
      %v669 = vpop.xlane.xlu0 %668
      %v670 = vsel %vm468, %v378, 0.0
      %671 = vadd.xlane.f32.xlu0 %v670
      %v672 = vpop.xlane.xlu0 %671
      %v673 = vsel %vm468, %v379, 0.0
      %674 = vadd.xlane.f32.xlu0 %v673
      %v675 = vpop.xlane.xlu0 %674
      %v676 = vsel %vm468, %v380, 0.0
      %677 = vadd.xlane.f32.xlu0 %v676
      %v678 = vpop.xlane.xlu0 %677
      %v679 = vsel %vm468, %v381, 0.0
      %680 = vadd.xlane.f32.xlu0 %v679
      %v681 = vpop.xlane.xlu0 %680
      %v682 = vsel %vm468, %v382, 0.0
      %683 = vadd.xlane.f32.xlu0 %v682
      %v684 = vpop.xlane.xlu0 %683
      %v685 = vsel %vm468, %v383, 0.0
      %686 = vadd.xlane.f32.xlu0 %v685
      %v687 = vpop.xlane.xlu0 %686
      %v688 = vsel %vm468, %v384, 0.0
      %689 = vadd.xlane.f32.xlu0 %v688
      %v690 = vpop.xlane.xlu0 %689
      %v691 = vsel %vm468, %v385, 0.0
      %692 = vadd.xlane.f32.xlu0 %v691
      %v693 = vpop.xlane.xlu0 %692
      %v694 = vsel %vm468, %v386, 0.0
      %695 = vadd.xlane.f32.xlu0 %v694
      %v696 = vpop.xlane.xlu0 %695
      %v697 = vsel %vm468, %v387, 0.0
      %698 = vadd.xlane.f32.xlu0 %v697
      %v699 = vpop.xlane.xlu0 %698
      %v700 = vsel %vm468, %v388, 0.0
      %701 = vadd.xlane.f32.xlu0 %v700
      %v702 = vpop.xlane.xlu0 %701
      %v703 = vsel %vm468, %v389, 0.0
      %704 = vadd.xlane.f32.xlu0 %v703
      %v705 = vpop.xlane.xlu0 %704
      %v706 = vsel %vm468, %v390, 0.0
      %707 = vadd.xlane.f32.xlu0 %v706
      %v708 = vpop.xlane.xlu0 %707
      %v709 = vsel %vm468, %v391, 0.0
      %710 = vadd.xlane.f32.xlu0 %v709
      %v711 = vpop.xlane.xlu0 %710
      %v712 = vsel %vm468, %v392, 0.0
      %713 = vadd.xlane.f32.xlu0 %v712
      %v714 = vpop.xlane.xlu0 %713
      %v715 = vsel %vm468, %v393, 0.0
      %716 = vadd.xlane.f32.xlu0 %v715
      %v717 = vpop.xlane.xlu0 %716
      %v718 = vsel %vm468, %v394, 0.0
      %719 = vadd.xlane.f32.xlu0 %v718
      %v720 = vpop.xlane.xlu0 %719
      %v721 = vsel %vm468, %v395, 0.0
      %722 = vadd.xlane.f32.xlu0 %v721
      %v723 = vpop.xlane.xlu0 %722
      %v724 = vsel %vm468, %v396, 0.0
      %725 = vadd.xlane.f32.xlu0 %v724
      %v726 = vpop.xlane.xlu0 %725
      %v727 = vsel %vm468, %v397, 0.0
      %728 = vadd.xlane.f32.xlu0 %v727
      %v729 = vpop.xlane.xlu0 %728
      %v730 = vsel %vm468, %v398, 0.0
      %731 = vadd.xlane.f32.xlu0 %v730
      %v732 = vpop.xlane.xlu0 %731
      %v733 = vsel %vm468, %v399, 0.0
      %734 = vadd.xlane.f32.xlu0 %v733
      %v735 = vpop.xlane.xlu0 %734
      %v736 = vsel %vm468, %v400, 0.0
      %737 = vadd.xlane.f32.xlu0 %v736
      %v738 = vpop.xlane.xlu0 %737
      %v739 = vsel %vm468, %v401, 0.0
      %740 = vadd.xlane.f32.xlu0 %v739
      %v741 = vpop.xlane.xlu0 %740
      %v742 = vsel %vm468, %v402, 0.0
      %743 = vadd.xlane.f32.xlu0 %v742
      %v744 = vpop.xlane.xlu0 %743
      %v745 = vsel %vm468, %v403, 0.0
      %746 = vadd.xlane.f32.xlu0 %v745
      %v747 = vpop.xlane.xlu0 %746
      %v748 = vsel %vm468, %v404, 0.0
      %749 = vadd.xlane.f32.xlu0 %v748
      %v750 = vpop.xlane.xlu0 %749
      %v751 = vsel %vm468, %v405, 0.0
      %752 = vadd.xlane.f32.xlu0 %v751
      %v753 = vpop.xlane.xlu0 %752
      %v754 = vsel %vm468, %v406, 0.0
      %755 = vadd.xlane.f32.xlu0 %v754
      %v756 = vpop.xlane.xlu0 %755
      %v757 = vsel %vm468, %v407, 0.0
      %758 = vadd.xlane.f32.xlu0 %v757
      %v759 = vpop.xlane.xlu0 %758
      %v760 = vsel %vm468, %v408, 0.0
      %761 = vadd.xlane.f32.xlu0 %v760
      %v762 = vpop.xlane.xlu0 %761
      %v763 = vsel %vm468, %v409, 0.0
      %764 = vadd.xlane.f32.xlu0 %v763
      %v765 = vpop.xlane.xlu0 %764
      %v766 = vsel %vm468, %v410, 0.0
      %767 = vadd.xlane.f32.xlu0 %v766
      %v768 = vpop.xlane.xlu0 %767
      %v769 = vsel %vm468, %v411, 0.0
      %770 = vadd.xlane.f32.xlu0 %v769
      %v771 = vpop.xlane.xlu0 %770
      %v772 = vsel %vm468, %v412, 0.0
      %773 = vadd.xlane.f32.xlu0 %v772
      %v774 = vpop.xlane.xlu0 %773
      %v775 = vsel %vm468, %v413, 0.0
      %776 = vadd.xlane.f32.xlu0 %v775
      %v777 = vpop.xlane.xlu0 %776
      %v778 = vsel %vm468, %v414, 0.0
      %779 = vadd.xlane.f32.xlu0 %v778
      %v780 = vpop.xlane.xlu0 %779
      %v781 = vsel %vm468, %v415, 0.0
      %782 = vadd.xlane.f32.xlu0 %v781
      %v783 = vpop.xlane.xlu0 %782
      %v784 = vsel %vm468, %v416, 0.0
      %785 = vadd.xlane.f32.xlu0 %v784
      %v786 = vpop.xlane.xlu0 %785
      %v787 = vsel %vm468, %v417, 0.0
      %788 = vadd.xlane.f32.xlu0 %v787
      %v789 = vpop.xlane.xlu0 %788
      %v790 = vsel %vm468, %v418, 0.0
      %791 = vadd.xlane.f32.xlu0 %v790
      %v792 = vpop.xlane.xlu0 %791
      %v793 = vsel %vm468, %v419, 0.0
      %794 = vadd.xlane.f32.xlu0 %v793
      %v795 = vpop.xlane.xlu0 %794
      %v796 = vsel %vm468, %v420, 0.0
      %797 = vadd.xlane.f32.xlu0 %v796
      %v798 = vpop.xlane.xlu0 %797
      %v799 = vsel %vm468, %v421, 0.0
      %800 = vadd.xlane.f32.xlu0 %v799
      %v801 = vpop.xlane.xlu0 %800
      %v802 = vsel %vm468, %v422, 0.0
      %803 = vadd.xlane.f32.xlu0 %v802
      %v804 = vpop.xlane.xlu0 %803
      %v805 = vsel %vm468, %v423, 0.0
      %806 = vadd.xlane.f32.xlu0 %v805
      %v807 = vpop.xlane.xlu0 %806
      %v808 = vsel %vm468, %v424, 0.0
      %809 = vadd.xlane.f32.xlu0 %v808
      %v810 = vpop.xlane.xlu0 %809
      %v811 = vsel %vm468, %v425, 0.0
      %812 = vadd.xlane.f32.xlu0 %v811
      %v813 = vpop.xlane.xlu0 %812
      %v814 = vsel %vm468, %v426, 0.0
      %815 = vadd.xlane.f32.xlu0 %v814
      %v816 = vpop.xlane.xlu0 %815
      %v817 = vsel %vm468, %v427, 0.0
      %818 = vadd.xlane.f32.xlu0 %v817
      %v819 = vpop.xlane.xlu0 %818
      %v820 = vsel %vm468, %v428, 0.0
      %821 = vadd.xlane.f32.xlu0 %v820
      %v822 = vpop.xlane.xlu0 %821
      %v823 = vsel %vm468, %v429, 0.0
      %824 = vadd.xlane.f32.xlu0 %v823
      %v825 = vpop.xlane.xlu0 %824
      %v826 = vsel %vm468, %v430, 0.0
      %827 = vadd.xlane.f32.xlu0 %v826
      %v828 = vpop.xlane.xlu0 %827
      %v829 = vsel %vm468, %v431, 0.0
      %830 = vadd.xlane.f32.xlu0 %v829
      %v831 = vpop.xlane.xlu0 %830
      %v832 = vsel %vm468, %v432, 0.0
      %833 = vadd.xlane.f32.xlu0 %v832
      %v834 = vpop.xlane.xlu0 %833
      %v835 = vsel %vm468, %v433, 0.0
      %836 = vadd.xlane.f32.xlu0 %v835
      %v837 = vpop.xlane.xlu0 %836
      %v838 = vsel %vm468, %v434, 0.0
      %839 = vadd.xlane.f32.xlu0 %v838
      %v840 = vpop.xlane.xlu0 %839
      %v841 = vsel %vm468, %v435, 0.0
      %842 = vadd.xlane.f32.xlu0 %v841
      %v843 = vpop.xlane.xlu0 %842
      %v844 = vsel %vm468, %v436, 0.0
      %845 = vadd.xlane.f32.xlu0 %v844
      %v846 = vpop.xlane.xlu0 %845
      %v847 = vsel %vm468, %v437, 0.0
      %848 = vadd.xlane.f32.xlu0 %v847
      %v849 = vpop.xlane.xlu0 %848
      %v850 = vsel %vm468, %v438, 0.0
      %851 = vadd.xlane.f32.xlu0 %v850
      %v852 = vpop.xlane.xlu0 %851
      %v853 = vsel %vm468, %v439, 0.0
      %854 = vadd.xlane.f32.xlu0 %v853
      %v855 = vpop.xlane.xlu0 %854
      %v856 = vsel %vm468, %v440, 0.0
      %857 = vadd.xlane.f32.xlu0 %v856
      %v858 = vpop.xlane.xlu0 %857
      %v859 = vsel %vm468, %v441, 0.0
      %860 = vadd.xlane.f32.xlu0 %v859
      %v861 = vpop.xlane.xlu0 %860
      %v862 = vsel %vm468, %v442, 0.0
      %863 = vadd.xlane.f32.xlu0 %v862
      %v864 = vpop.xlane.xlu0 %863
      %v865 = vsel %vm468, %v443, 0.0
      %866 = vadd.xlane.f32.xlu0 %v865
      %v867 = vpop.xlane.xlu0 %866
      %v868 = vsel %vm468, %v444, 0.0
      %869 = vadd.xlane.f32.xlu0 %v868
      %v870 = vpop.xlane.xlu0 %869
      %v871 = vsel %vm468, %v445, 0.0
      %872 = vadd.xlane.f32.xlu0 %v871
      %v873 = vpop.xlane.xlu0 %872
      %v874 = vsel %vm468, %v446, 0.0
      %875 = vadd.xlane.f32.xlu0 %v874
      %v876 = vpop.xlane.xlu0 %875
      %v877 = vsel %vm468, %v447, 0.0
      %878 = vadd.xlane.f32.xlu0 %v877
      %v879 = vpop.xlane.xlu0 %878
      %v880 = vsel %vm468, %v448, 0.0
      %881 = vadd.xlane.f32.xlu0 %v880
      %v882 = vpop.xlane.xlu0 %881
      %v883 = vsel %vm468, %v449, 0.0
      %884 = vadd.xlane.f32.xlu0 %v883
      %v885 = vpop.xlane.xlu0 %884
      %v886 = vsel %vm468, %v450, 0.0
      %887 = vadd.xlane.f32.xlu0 %v886
      %v888 = vpop.xlane.xlu0 %887
      %v889 = vsel %vm468, %v451, 0.0
      %890 = vadd.xlane.f32.xlu0 %v889
      %v891 = vpop.xlane.xlu0 %890
      %v892 = vsel %vm468, %v452, 0.0
      %893 = vadd.xlane.f32.xlu0 %v892
      %v894 = vpop.xlane.xlu0 %893
      %v895 = vsel %vm468, %v453, 0.0
      %896 = vadd.xlane.f32.xlu0 %v895
      %v897 = vpop.xlane.xlu0 %896
      %v898 = vsel %vm468, %v454, 0.0
      %899 = vadd.xlane.f32.xlu0 %v898
      %v900 = vpop.xlane.xlu0 %899
      %v901 = vsel %vm468, %v455, 0.0
      %902 = vadd.xlane.f32.xlu0 %v901
      %v903 = vpop.xlane.xlu0 %902
      %v904 = vsel %vm468, %v456, 0.0
      %905 = vadd.xlane.f32.xlu0 %v904
      %v906 = vpop.xlane.xlu0 %905
      %v907 = vsel %vm468, %v457, 0.0
      %908 = vadd.xlane.f32.xlu0 %v907
      %v909 = vpop.xlane.xlu0 %908
      %v910 = vsel %vm468, %v458, 0.0
      %911 = vadd.xlane.f32.xlu0 %v910
      %v912 = vpop.xlane.xlu0 %911
      %v913 = vsel %vm468, %v459, 0.0
      %914 = vadd.xlane.f32.xlu0 %v913
      %v915 = vpop.xlane.xlu0 %914
      %v916 = vsel %vm468, %v460, 0.0
      %917 = vadd.xlane.f32.xlu0 %v916
      %v918 = vpop.xlane.xlu0 %917
      %v919 = vsel %vm468, %v461, 0.0
      %920 = vadd.xlane.f32.xlu0 %v919
      %v921 = vpop.xlane.xlu0 %920
      %v922 = vsel %vm468, %v462, 0.0
      %923 = vadd.xlane.f32.xlu0 %v922
      %v924 = vpop.xlane.xlu0 %923
      %v925 = vsel %vm468, %v463, 0.0
      %926 = vadd.xlane.f32.xlu0 %v925
      %v927 = vpop.xlane.xlu0 %926
      %v928 = vsel %vm468, %v464, 0.0
      %929 = vadd.xlane.f32.xlu0 %v928
      %v930 = vpop.xlane.xlu0 %929
      %v931 = vsel %vm468, %v465, 0.0
      %932 = vadd.xlane.f32.xlu0 %v931
      %v933 = vpop.xlane.xlu0 %932
      %v934 = vsel %vm468, %v466, 0.0
      %935 = vadd.xlane.f32.xlu0 %v934
      %v936 = vpop.xlane.xlu0 %935
      %v937 = vsel %vm468, %v467, 0.0
      %938 = vadd.xlane.f32.xlu0 %v937
      %v939 = vpop.xlane.xlu0 %938
      %vm940 = vcmask 7168
      %941 = vst.msk [vmem:[%s145] sm:$0xff] %vm940, %v471
      %942 = vst.msk [vmem:[%s145 + $0x8] sm:$0xff] %vm940, %v474
      %943 = vst.msk [vmem:[%s145 + $0x10] sm:$0xff] %vm940, %v477
      %944 = vst.msk [vmem:[%s145 + $0x18] sm:$0xff] %vm940, %v480
      %945 = vst.msk [vmem:[%s145 + $0x20] sm:$0xff] %vm940, %v483
      %946 = vst.msk [vmem:[%s145 + $0x28] sm:$0xff] %vm940, %v486
      %947 = vst.msk [vmem:[%s145 + $0x30] sm:$0xff] %vm940, %v489
      %948 = vst.msk [vmem:[%s145 + $0x38] sm:$0xff] %vm940, %v492
      %949 = vst.msk [vmem:[%s145 + $0x40] sm:$0xff] %vm940, %v495
      %950 = vst.msk [vmem:[%s145 + $0x48] sm:$0xff] %vm940, %v498
      %951 = vst.msk [vmem:[%s145 + $0x50] sm:$0xff] %vm940, %v501
      %952 = vst.msk [vmem:[%s145 + $0x58] sm:$0xff] %vm940, %v504
      %953 = vst.msk [vmem:[%s145 + $0x60] sm:$0xff] %vm940, %v507
      %954 = vst.msk [vmem:[%s145 + $0x68] sm:$0xff] %vm940, %v510
      %955 = vst.msk [vmem:[%s145 + $0x70] sm:$0xff] %vm940, %v513
      %956 = vst.msk [vmem:[%s145 + $0x78] sm:$0xff] %vm940, %v516
      %957 = vst.msk [vmem:[%s145 + $0x80] sm:$0xff] %vm940, %v519
      %958 = vst.msk [vmem:[%s145 + $0x88] sm:$0xff] %vm940, %v522
      %959 = vst.msk [vmem:[%s145 + $0x90] sm:$0xff] %vm940, %v525
      %960 = vst.msk [vmem:[%s145 + $0x98] sm:$0xff] %vm940, %v528
      %961 = vst.msk [vmem:[%s145 + $0xa0] sm:$0xff] %vm940, %v531
      %962 = vst.msk [vmem:[%s145 + $0xa8] sm:$0xff] %vm940, %v534
      %963 = vst.msk [vmem:[%s145 + $0xb0] sm:$0xff] %vm940, %v537
      %964 = vst.msk [vmem:[%s145 + $0xb8] sm:$0xff] %vm940, %v540
      %965 = vst.msk [vmem:[%s145 + $0xc0] sm:$0xff] %vm940, %v543
      %966 = vst.msk [vmem:[%s145 + $0xc8] sm:$0xff] %vm940, %v546
      %967 = vst.msk [vmem:[%s145 + $0xd0] sm:$0xff] %vm940, %v549
      %968 = vst.msk [vmem:[%s145 + $0xd8] sm:$0xff] %vm940, %v552
      %969 = vst.msk [vmem:[%s145 + $0xe0] sm:$0xff] %vm940, %v555
      %970 = vst.msk [vmem:[%s145 + $0xe8] sm:$0xff] %vm940, %v558
      %971 = vst.msk [vmem:[%s145 + $0xf0] sm:$0xff] %vm940, %v561
      %972 = vst.msk [vmem:[%s145 + $0xf8] sm:$0xff] %vm940, %v564
      %973 = vst.msk [vmem:[%s145 + $0x100] sm:$0xff] %vm940, %v567
      %974 = vst.msk [vmem:[%s145 + $0x108] sm:$0xff] %vm940, %v570
      %975 = vst.msk [vmem:[%s145 + $0x110] sm:$0xff] %vm940, %v573
      %976 = vst.msk [vmem:[%s145 + $0x118] sm:$0xff] %vm940, %v576
      %977 = vst.msk [vmem:[%s145 + $0x120] sm:$0xff] %vm940, %v579
      %978 = vst.msk [vmem:[%s145 + $0x128] sm:$0xff] %vm940, %v582
      %979 = vst.msk [vmem:[%s145 + $0x130] sm:$0xff] %vm940, %v585
      %980 = vst.msk [vmem:[%s145 + $0x138] sm:$0xff] %vm940, %v588
      %981 = vst.msk [vmem:[%s145 + $0x140] sm:$0xff] %vm940, %v591
      %982 = vst.msk [vmem:[%s145 + $0x148] sm:$0xff] %vm940, %v594
      %983 = vst.msk [vmem:[%s145 + $0x150] sm:$0xff] %vm940, %v597
      %984 = vst.msk [vmem:[%s145 + $0x158] sm:$0xff] %vm940, %v600
      %985 = vst.msk [vmem:[%s145 + $0x160] sm:$0xff] %vm940, %v603
      %986 = vst.msk [vmem:[%s145 + $0x168] sm:$0xff] %vm940, %v606
      %987 = vst.msk [vmem:[%s145 + $0x170] sm:$0xff] %vm940, %v609
      %988 = vst.msk [vmem:[%s145 + $0x178] sm:$0xff] %vm940, %v612
      %989 = vst.msk [vmem:[%s145 + $0x180] sm:$0xff] %vm940, %v615
      %990 = vst.msk [vmem:[%s145 + $0x188] sm:$0xff] %vm940, %v618
      %991 = vst.msk [vmem:[%s145 + $0x190] sm:$0xff] %vm940, %v621
      %992 = vst.msk [vmem:[%s145 + $0x198] sm:$0xff] %vm940, %v624
      %993 = vst.msk [vmem:[%s145 + $0x1a0] sm:$0xff] %vm940, %v627
      %994 = vst.msk [vmem:[%s145 + $0x1a8] sm:$0xff] %vm940, %v630
      %995 = vst.msk [vmem:[%s145 + $0x1b0] sm:$0xff] %vm940, %v633
      %996 = vst.msk [vmem:[%s145 + $0x1b8] sm:$0xff] %vm940, %v636
      %997 = vst.msk [vmem:[%s145 + $0x1c0] sm:$0xff] %vm940, %v639
      %998 = vst.msk [vmem:[%s145 + $0x1c8] sm:$0xff] %vm940, %v642
      %999 = vst.msk [vmem:[%s145 + $0x1d0] sm:$0xff] %vm940, %v645
      %1000 = vst.msk [vmem:[%s145 + $0x1d8] sm:$0xff] %vm940, %v648
      %1001 = vst.msk [vmem:[%s145 + $0x1e0] sm:$0xff] %vm940, %v651
      %1002 = vst.msk [vmem:[%s145 + $0x1e8] sm:$0xff] %vm940, %v654
      %1003 = vst.msk [vmem:[%s145 + $0x1f0] sm:$0xff] %vm940, %v657
      %1004 = vst.msk [vmem:[%s145 + $0x1f8] sm:$0xff] %vm940, %v660
      %1005 = vst.msk [vmem:[%s145 + $0x200] sm:$0xff] %vm940, %v663
      %1006 = vst.msk [vmem:[%s145 + $0x208] sm:$0xff] %vm940, %v666
      %1007 = vst.msk [vmem:[%s145 + $0x210] sm:$0xff] %vm940, %v669
      %1008 = vst.msk [vmem:[%s145 + $0x218] sm:$0xff] %vm940, %v672
      %1009 = vst.msk [vmem:[%s145 + $0x220] sm:$0xff] %vm940, %v675
      %1010 = vst.msk [vmem:[%s145 + $0x228] sm:$0xff] %vm940, %v678
      %1011 = vst.msk [vmem:[%s145 + $0x230] sm:$0xff] %vm940, %v681
      %1012 = vst.msk [vmem:[%s145 + $0x238] sm:$0xff] %vm940, %v684
      %1013 = vst.msk [vmem:[%s145 + $0x240] sm:$0xff] %vm940, %v687
      %1014 = vst.msk [vmem:[%s145 + $0x248] sm:$0xff] %vm940, %v690
      %1015 = vst.msk [vmem:[%s145 + $0x250] sm:$0xff] %vm940, %v693
      %1016 = vst.msk [vmem:[%s145 + $0x258] sm:$0xff] %vm940, %v696
      %1017 = vst.msk [vmem:[%s145 + $0x260] sm:$0xff] %vm940, %v699
      %1018 = vst.msk [vmem:[%s145 + $0x268] sm:$0xff] %vm940, %v702
      %1019 = vst.msk [vmem:[%s145 + $0x270] sm:$0xff] %vm940, %v705
      %1020 = vst.msk [vmem:[%s145 + $0x278] sm:$0xff] %vm940, %v708
      %1021 = vst.msk [vmem:[%s145 + $0x280] sm:$0xff] %vm940, %v711
      %1022 = vst.msk [vmem:[%s145 + $0x288] sm:$0xff] %vm940, %v714
      %1023 = vst.msk [vmem:[%s145 + $0x290] sm:$0xff] %vm940, %v717
      %1024 = vst.msk [vmem:[%s145 + $0x298] sm:$0xff] %vm940, %v720
      %1025 = vst.msk [vmem:[%s145 + $0x2a0] sm:$0xff] %vm940, %v723
      %1026 = vst.msk [vmem:[%s145 + $0x2a8] sm:$0xff] %vm940, %v726
      %1027 = vst.msk [vmem:[%s145 + $0x2b0] sm:$0xff] %vm940, %v729
      %1028 = vst.msk [vmem:[%s145 + $0x2b8] sm:$0xff] %vm940, %v732
      %1029 = vst.msk [vmem:[%s145 + $0x2c0] sm:$0xff] %vm940, %v735
      %1030 = vst.msk [vmem:[%s145 + $0x2c8] sm:$0xff] %vm940, %v738
      %1031 = vst.msk [vmem:[%s145 + $0x2d0] sm:$0xff] %vm940, %v741
      %1032 = vst.msk [vmem:[%s145 + $0x2d8] sm:$0xff] %vm940, %v744
      %1033 = vst.msk [vmem:[%s145 + $0x2e0] sm:$0xff] %vm940, %v747
      %1034 = vst.msk [vmem:[%s145 + $0x2e8] sm:$0xff] %vm940, %v750
      %1035 = vst.msk [vmem:[%s145 + $0x2f0] sm:$0xff] %vm940, %v753
      %1036 = vst.msk [vmem:[%s145 + $0x2f8] sm:$0xff] %vm940, %v756
      %1037 = vst.msk [vmem:[%s145 + $0x300] sm:$0xff] %vm940, %v759
      %1038 = vst.msk [vmem:[%s145 + $0x308] sm:$0xff] %vm940, %v762
      %1039 = vst.msk [vmem:[%s145 + $0x310] sm:$0xff] %vm940, %v765
      %1040 = vst.msk [vmem:[%s145 + $0x318] sm:$0xff] %vm940, %v768
      %1041 = vst.msk [vmem:[%s145 + $0x320] sm:$0xff] %vm940, %v771
      %1042 = vst.msk [vmem:[%s145 + $0x328] sm:$0xff] %vm940, %v774
      %1043 = vst.msk [vmem:[%s145 + $0x330] sm:$0xff] %vm940, %v777
      %1044 = vst.msk [vmem:[%s145 + $0x338] sm:$0xff] %vm940, %v780
      %1045 = vst.msk [vmem:[%s145 + $0x340] sm:$0xff] %vm940, %v783
      %1046 = vst.msk [vmem:[%s145 + $0x348] sm:$0xff] %vm940, %v786
      %1047 = vst.msk [vmem:[%s145 + $0x350] sm:$0xff] %vm940, %v789
      %1048 = vst.msk [vmem:[%s145 + $0x358] sm:$0xff] %vm940, %v792
      %1049 = vst.msk [vmem:[%s145 + $0x360] sm:$0xff] %vm940, %v795
      %1050 = vst.msk [vmem:[%s145 + $0x368] sm:$0xff] %vm940, %v798
      %1051 = vst.msk [vmem:[%s145 + $0x370] sm:$0xff] %vm940, %v801
      %1052 = vst.msk [vmem:[%s145 + $0x378] sm:$0xff] %vm940, %v804
      %1053 = vst.msk [vmem:[%s145 + $0x380] sm:$0xff] %vm940, %v807
      %1054 = vst.msk [vmem:[%s145 + $0x388] sm:$0xff] %vm940, %v810
      %1055 = vst.msk [vmem:[%s145 + $0x390] sm:$0xff] %vm940, %v813
      %1056 = vst.msk [vmem:[%s145 + $0x398] sm:$0xff] %vm940, %v816
      %1057 = vst.msk [vmem:[%s145 + $0x3a0] sm:$0xff] %vm940, %v819
      %1058 = vst.msk [vmem:[%s145 + $0x3a8] sm:$0xff] %vm940, %v822
      %1059 = vst.msk [vmem:[%s145 + $0x3b0] sm:$0xff] %vm940, %v825
      %1060 = vst.msk [vmem:[%s145 + $0x3b8] sm:$0xff] %vm940, %v828
      %1061 = vst.msk [vmem:[%s145 + $0x3c0] sm:$0xff] %vm940, %v831
      %1062 = vst.msk [vmem:[%s145 + $0x3c8] sm:$0xff] %vm940, %v834
      %1063 = vst.msk [vmem:[%s145 + $0x3d0] sm:$0xff] %vm940, %v837
      %1064 = vst.msk [vmem:[%s145 + $0x3d8] sm:$0xff] %vm940, %v840
      %1065 = vst.msk [vmem:[%s145 + $0x3e0] sm:$0xff] %vm940, %v843
      %1066 = vst.msk [vmem:[%s145 + $0x3e8] sm:$0xff] %vm940, %v846
      %1067 = vst.msk [vmem:[%s145 + $0x3f0] sm:$0xff] %vm940, %v849
      %1068 = vst.msk [vmem:[%s145 + $0x3f8] sm:$0xff] %vm940, %v852
      %1069 = vst.msk [vmem:[%s145 + $0x400] sm:$0xff] %vm940, %v855
      %1070 = vst.msk [vmem:[%s145 + $0x408] sm:$0xff] %vm940, %v858
      %1071 = vst.msk [vmem:[%s145 + $0x410] sm:$0xff] %vm940, %v861
      %1072 = vst.msk [vmem:[%s145 + $0x418] sm:$0xff] %vm940, %v864
      %1073 = vst.msk [vmem:[%s145 + $0x420] sm:$0xff] %vm940, %v867
      %1074 = vst.msk [vmem:[%s145 + $0x428] sm:$0xff] %vm940, %v870
      %1075 = vst.msk [vmem:[%s145 + $0x430] sm:$0xff] %vm940, %v873
      %1076 = vst.msk [vmem:[%s145 + $0x438] sm:$0xff] %vm940, %v876
      %1077 = vst.msk [vmem:[%s145 + $0x440] sm:$0xff] %vm940, %v879
      %1078 = vst.msk [vmem:[%s145 + $0x448] sm:$0xff] %vm940, %v882
      %1079 = vst.msk [vmem:[%s145 + $0x450] sm:$0xff] %vm940, %v885
      %1080 = vst.msk [vmem:[%s145 + $0x458] sm:$0xff] %vm940, %v888
      %1081 = vst.msk [vmem:[%s145 + $0x460] sm:$0xff] %vm940, %v891
      %1082 = vst.msk [vmem:[%s145 + $0x468] sm:$0xff] %vm940, %v894
      %1083 = vst.msk [vmem:[%s145 + $0x470] sm:$0xff] %vm940, %v897
      %1084 = vst.msk [vmem:[%s145 + $0x478] sm:$0xff] %vm940, %v900
      %1085 = vst.msk [vmem:[%s145 + $0x480] sm:$0xff] %vm940, %v903
      %1086 = vst.msk [vmem:[%s145 + $0x488] sm:$0xff] %vm940, %v906
      %1087 = vst.msk [vmem:[%s145 + $0x490] sm:$0xff] %vm940, %v909
      %1088 = vst.msk [vmem:[%s145 + $0x498] sm:$0xff] %vm940, %v912
      %1089 = vst.msk [vmem:[%s145 + $0x4a0] sm:$0xff] %vm940, %v915
      %1090 = vst.msk [vmem:[%s145 + $0x4a8] sm:$0xff] %vm940, %v918
      %1091 = vst.msk [vmem:[%s145 + $0x4b0] sm:$0xff] %vm940, %v921
      %1092 = vst.msk [vmem:[%s145 + $0x4b8] sm:$0xff] %vm940, %v924
      %1093 = vst.msk [vmem:[%s145 + $0x4c0] sm:$0xff] %vm940, %v927
      %1094 = vst.msk [vmem:[%s145 + $0x4c8] sm:$0xff] %vm940, %v930
      %1095 = vst.msk [vmem:[%s145 + $0x4d0] sm:$0xff] %vm940, %v933
      %1096 = vst.msk [vmem:[%s145 + $0x4d8] sm:$0xff] %vm940, %v936
      %1097 = vst.msk [vmem:[%s145 + $0x4e0] sm:$0xff] %vm940, %v939
      %s1098 = smul.u32 157, %s13
      %p1099 = scmp.lt.s32.totalorder %s1098, 627
      %s1100 = scalar_select %p1099, %s1098, 627
      %s1101 = smul.addr %s1100, 8
      %s1102 = scalar_lea.vmem %s2, %s1101
      // Predicated region
      $region29: #{net_forward.1} parent=27 // pred_check
        %p1103 = pneg %p78
      $region30: #{net_forward.1} parent=27 // pred_check_branch
        %1105 = sbr.rel (%p1103) target = $region32
      $region31: #{net_forward.1} parent=27 // pred_region
        %s1106 = smul.u32 157, %s13
      $region32: #{net_forward.1} parent=27 // pred_fallthru
        _
    $region28: #{net_forward.1} parent=5 // pred_fallthru
      _
    %p1107 = scmp.le.s32.totalorder 2, %s8
    // Predicated region
    $region33: #{net_forward.1} parent=5 // pred_check
      %p1108 = pneg %p1107
    $region34: #{net_forward.1} parent=5 // pred_check_branch
      %1110 = sbr.rel (%p1108) target = $region36
    $region35: #{net_forward.1} parent=5 // pred_region
      %s1111 = ssub.s32 %s8, 2
      // Predicated region
      $region37: #{net_forward.1} parent=35 // pred_check
        %p1112 = pneg %p84
      $region38: #{net_forward.1} parent=35 // pred_check_branch
        %1114 = sbr.rel (%p1112) target = $region40
      $region39: #{net_forward.1} parent=35 // pred_region
        %s1115 = smul.u32 157, %s14
        %p1116 = scmp.lt.s32.totalorder %s1115, 627
        %s1117 = scalar_select %p1116, %s1115, 627
        %s1118 = smul.addr %s1117, 8
        %s1119 = scalar_lea.vmem %s2, %s1118
      $region40: #{net_forward.1} parent=35 // pred_fallthru
        _
    $region36: #{net_forward.1} parent=5 // pred_fallthru
      _
  $region6: #{net_forward.1} parent=0 // loop_footer
    %s12 = sadd.s32 1, %s8
  $region7: #{net_forward.1} parent=0 // loop_footer_branch
    %7 = sbr.rel target = $region3
  $region8: #{net_forward.1} parent=0 // loop_exit
    _

</llo_original>
